<compile_context>
chip_gen: v5e
topology: v5e:2x2
jax: 0.10.0
libtpu: 0.0.40
codegen_flags: <defaults>
</compile_context>

<pallas_src>
import functools

import jax
import jax.numpy as jnp
from jax import lax
from jax.experimental import pallas as pl
from jax.experimental.pallas import tpu as pltpu


def _round_up(x, m):
    return ((x + m - 1) // m) * m


_ROLL_LIKE_JNP = None


def _roll_semantics_like_jnp():
    """One-time probe of pltpu.roll's shift direction (vs. jnp.roll)."""
    global _ROLL_LIKE_JNP
    if _ROLL_LIKE_JNP is None:
        def probe(x_ref, o_ref):
            o_ref[...] = pltpu.roll(x_ref[...], 1, 1)

        x = jnp.broadcast_to(jnp.arange(128, dtype=jnp.float32), (8, 128))
        y = pl.pallas_call(
            probe, out_shape=jax.ShapeDtypeStruct((8, 128), jnp.float32))(x)
        # jnp.roll(x, 1) puts x[..., 127] at position 0.
        _ROLL_LIKE_JNP = bool(y[0, 0] == 127.0)
    return _ROLL_LIKE_JNP


def _projection_kernel(P_ref, coef_ref, phase_ref, v_ref, o_ref, *,
                       inv_half, eps, grid_r, roll_like_jnp):
    # P_ref:     SMEM [B, 12] row-major 3x4 projection matrix     (prefetch)
    # coef_ref:  SMEM [B, 7]  distortion coeffs pre-folded w/ 2/s (prefetch)
    # phase_ref: VMEM [TILE_R, 128] f32 coordinate phase 0/1/2 (block-local)
    # v_ref:     VMEM [TILE_R, 128] interleaved flat  x y z x y z ...
    # o_ref:     VMEM [TILE_R, 128] interleaved flat  x'' y'' z x'' y'' z ...
    step = pl.program_id(0)
    b = step // grid_r

    p00 = P_ref[b, 0];  p01 = P_ref[b, 1];  p02 = P_ref[b, 2];  p03 = P_ref[b, 3]
    p10 = P_ref[b, 4];  p11 = P_ref[b, 5];  p12 = P_ref[b, 6];  p13 = P_ref[b, 7]
    p20 = P_ref[b, 8];  p21 = P_ref[b, 9];  p22 = P_ref[b, 10]; p23 = P_ref[b, 11]

    rk1 = coef_ref[b, 0]; rk2 = coef_ref[b, 1]; rk3 = coef_ref[b, 2]
    tx1 = coef_ref[b, 3]; tx2 = coef_ref[b, 4]
    ty1 = coef_ref[b, 5]; ty2 = coef_ref[b, 6]

    a = v_ref[...]                      # [TILE_R, 128], flat interleaved
    ph = phase_ref[...]                 # [TILE_R, 128], 0.=x, 1.=y, 2.=z slot
    is_x = ph == 0.0
    is_y = ph == 1.0

    lane = lax.broadcasted_iota(jnp.int32, a.shape, 1)

    def rot(x, k, axis):
        # result[i] = x[(i + k) mod n] along `axis`; always non-negative shift.
        n = x.shape[axis]
        s = (-k) % n if roll_like_jnp else k % n
        return pltpu.roll(x, s, axis)

    # Flat-order shifts A[f+1], A[f+2], A[f-1], A[f-2] (row-major inside the
    # block).  Lane 127/126 (resp. 0/1) take their value from the neighbouring
    # row via an extra sublane roll; blocks are vertex-aligned so the wrapped
    # lanes are never selected by the phase masks below.
    f1 = rot(a, 1, 1);   f1w = rot(f1, 1, 0)
    s_p1 = jnp.where(lane == 127, f1w, f1)
    f2 = rot(a, 2, 1);   f2w = rot(f2, 1, 0)
    s_p2 = jnp.where(lane >= 126, f2w, f2)
    g1 = rot(a, -1, 1);  g1w = rot(g1, -1, 0)
    s_m1 = jnp.where(lane == 0, g1w, g1)
    g2 = rot(a, -2, 1);  g2w = rot(g2, -1, 0)
    s_m2 = jnp.where(lane <= 1, g2w, g2)

    # De-interleave: every flat position now sees its own vertex's (x, y, z).
    vx = jnp.where(is_x, a, jnp.where(is_y, s_m1, s_m2))
    vy = jnp.where(is_x, s_p1, jnp.where(is_y, a, s_m1))
    vz = jnp.where(is_x, s_p2, jnp.where(is_y, s_p1, a))

    # Homogeneous projection [x y z 1] @ P^T, unrolled on the VPU.
    x = p00 * vx + p01 * vy + p02 * vz + p03
    y = p10 * vx + p11 * vy + p12 * vz + p13
    z = p20 * vx + p21 * vy + p22 * vz + p23

    # Perspective divide: EUP approx reciprocal + one Newton step (kept: the
    # EUP slot is otherwise idle and the Newton step restores f32 accuracy).
    zez = z + eps
    inv0 = pl.reciprocal(zez, approx=True)
    inv_z = inv0 * (2.0 - zez * inv0)
    x_ = x * inv_z
    y_ = y * inv_z

    # Radial/tangential distortion + NDC.  2/orig_size is folded into every
    # coefficient (scaled Horner), so no separate normalization multiply.
    x2 = x_ * x_
    y2 = y_ * y_
    r2 = x2 + y2
    xy = x_ * y_
    rad = inv_half + r2 * (rk1 + r2 * (rk2 + r2 * rk3))     # (2/s) * radial
    out_x = x_ * rad + tx1 * xy + tx2 * (r2 + 2.0 * x2) - 1.0
    out_y = y_ * rad + ty1 * (r2 + 2.0 * y2) + ty2 * xy - 1.0

    # Re-interleave on write: x'' at x slots, y'' at y slots, projected z else.
    o_ref[...] = jnp.where(is_x, out_x, jnp.where(is_y, out_y, z))


def projection_pallas(vertices, P, dist_coeffs, orig_size, eps=1e-9,
                      tile_rows=3072):
    """vertices: [B, N, 3] f32, P: [B, 3, 4], dist_coeffs: [B, 5] (k1,k2,p1,p2,k3).

    Returns [B, N, 3] f32 matching soft_renderer.functional.projection."""
    B, N, C = vertices.shape
    assert C == 3, vertices.shape
    if dist_coeffs is None:
        dist_coeffs = jnp.zeros((B, 5), jnp.float32)
    inv_half = 2.0 / float(orig_size)

    L = 3 * N                                  # flat interleaved length / batch
    rows_min = -(-L // 128)
    # Row tile: multiple of 24 (= lcm(8 sublanes, xyz period 3)) so every block
    # starts/ends on a vertex boundary and one phase plane serves all blocks.
    tile_r = max(24, min(_round_up(int(tile_rows), 24), _round_up(rows_min, 24)))
    if L % 128 == 0 and rows_min >= tile_r:
        rows = rows_min                        # zero-copy path (no padding)
    else:
        rows = _round_up(rows_min, tile_r)     # small / unaligned inputs
    L_pad = rows * 128
    grid_r = -(-rows // tile_r)
    grid = (B * grid_r,)

    v_flat = vertices.astype(jnp.float32).reshape(B, L)
    if L_pad != L:
        # TODO(synk): for large non-128-aligned N this pad is one extra HBM
        # pass; a manual-DMA ragged tail would remove it.
        v_flat = jnp.pad(v_flat, ((0, 0), (0, L_pad - L)))
    v2d = v_flat.reshape(B, rows, 128)         # free: same row-major bytes

    # Per-batch scalars (SMEM prefetch).  Fold 2/orig_size and the 2*p1 / 2*p2
    # factors here so the kernel never multiplies by inv_half on the VPU.
    d = dist_coeffs.astype(jnp.float32)
    k1, k2, t1, t2, k3 = d[:, 0], d[:, 1], d[:, 2], d[:, 3], d[:, 4]
    coef = jnp.stack([k1 * inv_half, k2 * inv_half, k3 * inv_half,
                      2.0 * t1 * inv_half, t2 * inv_half,
                      t1 * inv_half, 2.0 * t2 * inv_half], axis=1)
    P_flat = P.reshape(B, 12).astype(jnp.float32)

    # Coordinate-phase plane (flat index % 3) for one tile.  Identical for all
    # blocks (tile_r % 3 == 0), so its block index is constant and it is DMA'd
    # exactly once.
    rr = jnp.arange(tile_r, dtype=jnp.int32)[:, None]
    ll = jnp.arange(128, dtype=jnp.int32)[None, :]
    phase = ((128 * rr + ll) % 3).astype(jnp.float32)

    roll_like_jnp = _roll_semantics_like_jnp()
    kernel = functools.partial(_projection_kernel,
                               inv_half=inv_half, eps=float(eps),
                               grid_r=grid_r, roll_like_jnp=roll_like_jnp)

    def v_index(i, P_r, c_r):
        return (i // grid_r, i % grid_r, 0)

    def phase_index(i, P_r, c_r):
        return (0, 0)

    def _call(v_spec):
        return pl.pallas_call(
            kernel,
            out_shape=jax.ShapeDtypeStruct((B, rows, 128), jnp.float32),
            grid_spec=pltpu.PrefetchScalarGridSpec(
                num_scalar_prefetch=2,
                grid=grid,
                in_specs=[pl.BlockSpec((tile_r, 128), phase_index), v_spec],
                out_specs=pl.BlockSpec((None, tile_r, 128), v_index),
            ),
            compiler_params=pltpu.CompilerParams(
                dimension_semantics=("parallel",),
                vmem_limit_bytes=48 * 1024 * 1024,
            ),
        )(P_flat, coef, phase, v2d)

    # Prefer 3-deep input buffering (hides DMA jitter when both v7x TCs share
    # HBM); fall back to the default double buffer if unsupported.
    v_specs = []
    if hasattr(pl, "Buffered"):
        try:
            v_specs.append(pl.BlockSpec((None, tile_r, 128), v_index,
                                        pipeline_mode=pl.Buffered(3)))
        except Exception:
            pass
    v_specs.append(pl.BlockSpec((None, tile_r, 128), v_index))

    out2d = None
    for i, v_spec in enumerate(v_specs):
        try:
            out2d = _call(v_spec)
            break
        except Exception:
            if i == len(v_specs) - 1:
                raise

    out_flat = out2d.reshape(B, L_pad)
    if L_pad != L:
        out_flat = out_flat[:, :L]
    return out_flat.reshape(B, N, 3)


def projection_ref(vertices, P, dist_coeffs, orig_size, eps=1e-9):
    """Pure-JAX reference (mirrors soft_renderer.functional.projection)."""
    ones = jnp.ones_like(vertices[:, :, :1])
    v = jnp.concatenate([vertices, ones], axis=-1)                 # [B, N, 4]
    v = jnp.einsum('bnc,bkc->bnk', v, P)                           # bmm(v, P^T)
    x, y, z = v[:, :, 0], v[:, :, 1], v[:, :, 2]
    x_ = x / (z + eps)
    y_ = y / (z + eps)
    k1 = dist_coeffs[:, None, 0]; k2 = dist_coeffs[:, None, 1]
    p1 = dist_coeffs[:, None, 2]; p2 = dist_coeffs[:, None, 3]
    k3 = dist_coeffs[:, None, 4]
    r = jnp.sqrt(x_ ** 2 + y_ ** 2)
    x__ = x_ * (1 + k1 * r**2 + k2 * r**4 + k3 * r**6) + 2 * p1 * x_ * y_ + p2 * (r**2 + 2 * x_**2)
    y__ = y_ * (1 + k1 * r**2 + k2 * r**4 + k3 * r**6) + p1 * (r**2 + 2 * y_**2) + 2 * p2 * x_ * y_
    x__ = 2 * (x__ - orig_size / 2.) / orig_size
    y__ = 2 * (y__ - orig_size / 2.) / orig_size
    return jnp.stack([x__, y__, z], axis=-1)


if __name__ == "__main__":
    key = jax.random.PRNGKey(0)
    kv, kp, kd = jax.random.split(key, 3)
    orig_size = 512

    def make_inputs(B, N):
        v = jax.random.normal(kv, (B, N, 3), dtype=jnp.float32)
        v = v.at[:, :, 2].add(5.0)                  # keep z well away from zero
        Pm = jax.random.normal(kp, (B, 3, 4), dtype=jnp.float32) * 0.1
        Pm = Pm.at[:, 2, 2].add(1.0)                # z row roughly identity-like
        dist = jax.random.normal(kd, (B, 5), dtype=jnp.float32) * 0.01
        return v, Pm, dist

    # (B, N, tile_rows): tiny padded path, multi-block zero-copy path, and a
    # clipped (partial) final block.
    checks = [
        (2, 8, 3072),
        (2, 2048, 24),
        (2, 1664, 24),
    ]
    for B, N, tr in checks:
        v, Pm, dist = make_inputs(B, N)
        out = jax.block_until_ready(
            projection_pallas(v, Pm, dist, orig_size, tile_rows=tr))
        ref = projection_ref(v, Pm, dist, orig_size)
        assert out.shape == (B, N, 3), out.shape
        err = float(jnp.max(jnp.abs(out - ref)))
        assert err < 1e-4, (B, N, err)

    print("KERNEL_OK")
</pallas_src>

<mosaic_0001>
module attributes {stable_mosaic.version = 11 : i64} {
  func.func @probe(%arg0: memref<8x128xf32, #tpu.memory_space<vmem>>, %arg1: memref<8x128xf32, #tpu.memory_space<vmem>>) attributes {dimension_semantics = [], scalar_prefetch = 0 : i64, scratch_operands = 0 : i64, tpu.core_type = #tpu.core_type<tc>} {
    %c0 = arith.constant 0 : index
    %c0_0 = arith.constant 0 : index
    %0 = vector.load %arg0[%c0, %c0_0] : memref<8x128xf32, #tpu.memory_space<vmem>>, vector<8x128xf32>
    %c1_i32 = arith.constant 1 : i32
    %1 = tpu.dynamic_rotate %0 by %c1_i32 dim 1 : vector<8x128xf32>, i32 -> vector<8x128xf32>
    %c0_1 = arith.constant 0 : index
    %c0_2 = arith.constant 0 : index
    %2 = vector.load %arg1[%c0_1, %c0_2] : memref<8x128xf32, #tpu.memory_space<vmem>>, vector<8x128xf32>
    tpu.vector_store %arg1[%c0_1, %c0_2], %1 {strides = array<i32>} : memref<8x128xf32, #tpu.memory_space<vmem>>, vector<8x128xf32>,
    return
  }
}

</mosaic_0001>

<llo_original>
// kernel: tpu_custom_call.1
$region0: #{tpu_custom_call.1}
  #allocation0 [shape = 'u32[]', space=smem, size = 0x4, offset = 0x4, fixed_abs, tag = 'smem constant byte address 0x4 - core index']
  #allocation1 [shape = 'u32[72,128]{1,0:T(1,128)}', space=vmem, size = 0x9000, scoped, tag = 'internal scratch']
  %s0 = inlined_call_operand.hbm [shape: f32[8,128], index: 0, kind: input, shape index: {}]
  %s1 = inlined_call_operand.hbm [shape: f32[8,128], index: 1, kind: output, shape index: {}]
  %s2 = sld [smem:[#allocation0]]
  $region18: #{tpu_custom_call.1} parent=0
    _
  %s4 = ssub.s32 1, %s2
  %s5 = scalar_select 0, %s4, %s2
  $region1: #{tpu_custom_call.1} parent=0
    #allocation2 [shape = 'u8[4096]{0}', space=vmem, size = 0x1000, scoped, tag = 'input window, operand 0, single buffered']
    #allocation3 [shape = 's32[1]{0}', space=sflag, size = 0x4, scoped, tag = 'scoped memory for tpu_custom_call.1']
    #allocation4 [shape = 's32[1]{0}', space=sflag, size = 0x4, scoped, tag = 'scoped memory for tpu_custom_call.1']
    #allocation5 [shape = 'u8[4096]{0}', space=vmem, size = 0x1000, scoped, tag = 'output window, operand 0, single buffered']
    %6 = vsyncpa [#allocation3], 0
    %7 = vsyncpa [#allocation4], 0
    // Predicated region
    $region2: #{tpu_custom_call.1} parent=1 // pred_check
      _
    $region3: #{tpu_custom_call.1} parent=1 // pred_check_branch
      %9 = sbr.rel (0) target = $region5
    $region4: #{tpu_custom_call.1} parent=1 // pred_region
      %11 = vsyncadd [#allocation3], 0
      %s13 = sshll.u32 %s0, 4
      %s14 = int_to_ptr.hbm [resolvable:$true] %s13
      %s15 = sshll.u32 [#allocation2], 4
      %s16 = int_to_ptr.vmem [resolvable:$true] %s15
      %18 = dma.hbm_to_vmem [thread:$0]  %s14, 128, %s16, [#allocation3]
    $region5: #{tpu_custom_call.1} parent=1 // pred_fallthru
      _
    // Predicated region
    $region6: #{tpu_custom_call.1} parent=1 // pred_check
      _
    $region7: #{tpu_custom_call.1} parent=1 // pred_check_branch
      %20 = sbr.rel (0) target = $region9
    $region8: #{tpu_custom_call.1} parent=1 // pred_region
      %22 = dma.done [#allocation3], 128
    $region9: #{tpu_custom_call.1} parent=1 // pred_fallthru
      _
    %v23 = vld [vmem:[#allocation2] sm:$0xff]
    %24 = vrot.lane.b32.xlu0 %v23, 1
    %v25 = vpop.permute.xlu0 %24
    %26 = vst [vmem:[#allocation5] sm:$0xff] %v25
    // Predicated region
    $region10: #{tpu_custom_call.1} parent=1 // pred_check
      _
    $region11: #{tpu_custom_call.1} parent=1 // pred_check_branch
      %28 = sbr.rel (0) target = $region13
    $region12: #{tpu_custom_call.1} parent=1 // pred_region
      %30 = vsyncadd [#allocation4], 0
      %s32 = sshll.u32 [#allocation5], 4
      %s33 = int_to_ptr.vmem [resolvable:$true] %s32
      %s34 = sshll.u32 %s1, 4
      %s35 = int_to_ptr.hbm [resolvable:$true] %s34
      %37 = dma.vmem_to_hbm [thread:$0]  %s33, 128, %s35, [#allocation4]
    $region13: #{tpu_custom_call.1} parent=1 // pred_fallthru
      _
    // Predicated region
    $region14: #{tpu_custom_call.1} parent=1 // pred_check
      _
    $region15: #{tpu_custom_call.1} parent=1 // pred_check_branch
      %39 = sbr.rel (0) target = $region17
    $region16: #{tpu_custom_call.1} parent=1 // pred_region
      %41 = dma.done [#allocation4], 128
    $region17: #{tpu_custom_call.1} parent=1 // pred_fallthru
      _
    %42 = vsyncpa [#allocation3], 1
    %43 = vsyncpa [#allocation4], 1

</llo_original>
